<compile_context>
chip_gen: v7x
topology: tpu7x:2x2x1
jax: 0.10.0
libtpu: 0.0.40
codegen_flags: <defaults>
</compile_context>

<pallas_src>
import functools

import jax
import jax.numpy as jnp
from jax import lax
from jax.experimental import pallas as pl
from jax.experimental.pallas import tpu as pltpu


def _round_up(x, m):
    return (x + m - 1) // m * m


_VMEM_LIMIT = 48 * 1024 * 1024   # > 32 MiB scoped default, < 64 MiB v7x physical


# ---------------------------------------------------------------------------
# Kernel 1: tiled GEMM + bias (bf16 operands, f32 accumulation)
# ---------------------------------------------------------------------------
def _matmul_bias_kernel_single(x_ref, wt_ref, b_ref, o_ref):
    acc = jnp.dot(x_ref[...], wt_ref[...], preferred_element_type=jnp.float32)
    o_ref[...] = (acc + b_ref[...]).astype(o_ref.dtype)


def _matmul_bias_kernel_multi(x_ref, wt_ref, b_ref, o_ref, acc_ref):
    k = pl.program_id(2)

    @pl.when(k == 0)
    def _():
        acc_ref[...] = jnp.zeros_like(acc_ref)

    acc_ref[...] += jnp.dot(x_ref[...], wt_ref[...],
                            preferred_element_type=jnp.float32)

    @pl.when(k == pl.num_programs(2) - 1)
    def _():
        o_ref[...] = (acc_ref[...] + b_ref[...]).astype(o_ref.dtype)


def pallas_matmul_bias(x, w_t, bias, out_dtype=None):
    """out[M, N] = x[M, K] @ w_t[K, N] + bias[N], tiled Pallas GEMM.

    MXU operands are cast to bf16 (f32 accumulation).  K is consumed in a single
    reduction step whenever it fits, which removes the k grid axis, the
    accumulator init/epilogue and all K padding for every conv in this module.
    """
    M, K = x.shape
    K2, N = w_t.shape
    assert K == K2, (K, K2)
    out_dtype = out_dtype or x.dtype

    x = x.astype(jnp.bfloat16)
    w_t = w_t.astype(jnp.bfloat16)
    bias = bias.astype(jnp.float32)

    tm = min(512, _round_up(M, 8))
    tn = min(512, _round_up(N, 128))
    Mp, Np = _round_up(M, tm), _round_up(N, tn)

    if Mp != M:
        x = jnp.pad(x, ((0, Mp - M), (0, 0)))
    if Np != N:
        w_t = jnp.pad(w_t, ((0, 0), (0, Np - N)))
        bias = jnp.pad(bias, (0, Np - N))
    bias2d = bias.reshape(1, Np)

    if K <= 2048:
        # Single K pass: tk == K exactly (full dim, no padding, no revisits).
        out = pl.pallas_call(
            _matmul_bias_kernel_single,
            out_shape=jax.ShapeDtypeStruct((Mp, Np), out_dtype),
            grid_spec=pltpu.PrefetchScalarGridSpec(
                num_scalar_prefetch=0,
                grid=(Mp // tm, Np // tn),
                in_specs=[
                    pl.BlockSpec((tm, K), lambda i, j: (i, 0)),
                    pl.BlockSpec((K, tn), lambda i, j: (0, j)),
                    pl.BlockSpec((1, tn), lambda i, j: (0, j)),   # bias: j only
                ],
                out_specs=pl.BlockSpec((tm, tn), lambda i, j: (i, j)),
            ),
            compiler_params=pltpu.CompilerParams(
                dimension_semantics=("parallel", "parallel"),
                vmem_limit_bytes=_VMEM_LIMIT),
        )(x, w_t, bias2d)
    else:
        nk = pl.cdiv(K, 2048)
        tk = _round_up(pl.cdiv(K, nk), 128)
        Kp = nk * tk
        if Kp != K:
            x = jnp.pad(x, ((0, 0), (0, Kp - K)))
            w_t = jnp.pad(w_t, ((0, Kp - K), (0, 0)))
        out = pl.pallas_call(
            _matmul_bias_kernel_multi,
            out_shape=jax.ShapeDtypeStruct((Mp, Np), out_dtype),
            grid_spec=pltpu.PrefetchScalarGridSpec(
                num_scalar_prefetch=0,
                grid=(Mp // tm, Np // tn, nk),
                in_specs=[
                    pl.BlockSpec((tm, tk), lambda i, j, k: (i, k)),
                    pl.BlockSpec((tk, tn), lambda i, j, k: (k, j)),
                    pl.BlockSpec((1, tn), lambda i, j, k: (0, j)),
                ],
                out_specs=pl.BlockSpec((tm, tn), lambda i, j, k: (i, j)),
                scratch_shapes=[pltpu.VMEM((tm, tn), jnp.float32)],
            ),
            compiler_params=pltpu.CompilerParams(
                dimension_semantics=("parallel", "parallel", "arbitrary"),
                vmem_limit_bytes=_VMEM_LIMIT),
        )(x, w_t, bias2d)

    if Mp != M or Np != N:
        out = out[:M, :N]
    return out


# ---------------------------------------------------------------------------
# Quaternion convolution = Hamilton-product weight (built once at init) + GEMM
# ---------------------------------------------------------------------------
def _make_qconv_params(key, in_ch, out_ch, ksize):
    assert in_ch % 4 == 0 and out_ch % 4 == 0
    o4, i4 = out_ch // 4, in_ch // 4
    kr, ki, kj, kk = jax.random.split(key, 4)
    shape = (o4, i4, ksize, ksize)
    r = 0.02 * jax.random.normal(kr, shape, jnp.float32)   # init.normal_(std=0.02)
    i = 0.02 * jax.random.normal(ki, shape, jnp.float32)
    j = 0.02 * jax.random.normal(kj, shape, jnp.float32)
    k = 0.02 * jax.random.normal(kk, shape, jnp.float32)
    # Hamilton product weight [out_ch, in_ch, kh, kw] (same matrix quaternion_conv
    # assembles before F.conv2d).
    w = jnp.concatenate([
        jnp.concatenate([r, -i, -j, -k], axis=1),
        jnp.concatenate([i,  r, -k,  j], axis=1),
        jnp.concatenate([j,  k,  r, -i], axis=1),
        jnp.concatenate([k, -j,  i,  r], axis=1),
    ], axis=0)
    # Pre-transposed GEMM layout [kh*kw*in_ch, out_ch]; stored bf16 once at init so
    # the MXU operands need no per-call casts / transposes.
    w_t = jnp.transpose(w, (2, 3, 1, 0)).reshape(ksize * ksize * in_ch, out_ch)
    return {"w_t": w_t.astype(jnp.bfloat16),
            "bias": jnp.zeros((out_ch,), jnp.float32),   # QuaternionConv zero bias
            "ksize": ksize}


def _im2col(x_nhwc, ksize):
    """[B,H,W,C] -> [B*H*W, ksize*ksize*C] ('same' padding, stride 1)."""
    B, H, W, Cin = x_nhwc.shape
    if ksize == 1:
        return x_nhwc.reshape(B * H * W, Cin)
    p = ksize // 2
    xp = jnp.pad(x_nhwc, ((0, 0), (p, p), (p, p), (0, 0)))
    taps = [xp[:, dy:dy + H, dx:dx + W, :]
            for dy in range(ksize) for dx in range(ksize)]
    return jnp.concatenate(taps, axis=-1).reshape(B * H * W, ksize * ksize * Cin)


def qconv_apply(p, x_nhwc, out_dtype=jnp.bfloat16):
    B, H, W, _ = x_nhwc.shape
    cols = _im2col(x_nhwc.astype(jnp.bfloat16), p["ksize"])
    out = pallas_matmul_bias(cols, p["w_t"], p["bias"], out_dtype=out_dtype)
    return out.reshape(B, H, W, -1)


# ---------------------------------------------------------------------------
# Kernels 2+3: channel attention on the [B, HW, 3C] slab, hw-tiled, all heads/step
# ---------------------------------------------------------------------------
def _attn_stats_kernel(qkv_ref, tpc_ref, attn_ref, g_ref, sq_ref, sk_ref, *, C, ch):
    t = pl.program_id(1)

    @pl.when(t == 0)
    def _():
        g_ref[...] = jnp.zeros_like(g_ref)
        sq_ref[...] = jnp.zeros_like(sq_ref)
        sk_ref[...] = jnp.zeros_like(sk_ref)

    blk = qkv_ref[0]                       # [thw, 3C] (bf16) ; q | k | v slices
    q = blk[:, 0:C]
    k = blk[:, C:2 * C]
    qf = q.astype(jnp.float32)
    kf = k.astype(jnp.float32)

    # Accumulators over the hw axis (zero-padded rows contribute exactly 0).
    sq_ref[...] += jnp.sum(qf * qf, axis=0, keepdims=True)          # (1, C)
    sk_ref[...] += jnp.sum(kf * kf, axis=0, keepdims=True)          # (1, C)
    # Channel Gram matrix, all heads in one MXU op: G[c, d] += sum_hw q[hw,c] k[hw,d]
    g_ref[...] += lax.dot_general(q, k, (((0,), (0,)), ((), ())),
                                  preferred_element_type=jnp.float32)

    @pl.when(t == pl.num_programs(1) - 1)
    def _():
        # F.normalize(dim=-1): 1 / max(||x||, 1e-12) == rsqrt(max(sum_sq, 1e-24))
        inv_q = lax.rsqrt(jnp.maximum(sq_ref[...], 1e-24))           # (1, C)
        inv_k = lax.rsqrt(jnp.maximum(sk_ref[...], 1e-24))           # (1, C)
        row = lax.broadcasted_iota(jnp.int32, (C, C), 0)
        col = lax.broadcasted_iota(jnp.int32, (C, C), 1)
        eye = (row == col).astype(jnp.float32)
        # Row scaling by 1/||q_c|| via a tiny diag matmul (no sublane relayout).
        logits = jnp.dot(eye * inv_q, g_ref[...],
                         preferred_element_type=jnp.float32)
        logits = logits * inv_k * tpc_ref[...]        # lane bcast: 1/||k_d||, temp
        # Block-diagonal (per-head) softmax over the full C axis.
        same_head = (row // ch) == (col // ch)
        logits = jnp.where(same_head, logits, jnp.float32(-1e30))
        logits = logits - jnp.max(logits, axis=-1, keepdims=True)
        e = jnp.exp(logits)
        denom = jnp.sum(e, axis=-1, keepdims=True)
        attn_ref[0] = (e * pl.reciprocal(denom, approx=True)).astype(attn_ref.dtype)


def _attn_apply_kernel(qkv_ref, attn_ref, o_ref, *, C):
    v = qkv_ref[0][:, 2 * C:3 * C].astype(jnp.float32)   # [thw, C]
    a = attn_ref[0]                                      # [C, C] block-diag softmax
    # out[hw, c] = sum_d attn[c, d] * v[hw, d]
    out = lax.dot_general(v, a, (((1,), (1,)), ((), ())),
                          preferred_element_type=jnp.float32)
    o_ref[0] = out.astype(o_ref.dtype)


def pallas_channel_attention(qkv, temperature, num_heads, hw_block=2048):
    """qkv: [B, HW, 3C] channel-last (q|k|v).  Returns [B, HW, C]."""
    B, HW, C3 = qkv.shape
    C = C3 // 3
    ch = C // num_heads

    thw = _round_up(min(hw_block, HW), 8)
    HWp = _round_up(HW, thw)
    if HWp != HW:
        qkv = jnp.pad(qkv, ((0, 0), (0, HWp - HW), (0, 0)))
    n_hw = HWp // thw

    # Per-channel temperature row so the per-head scale is a pure lane broadcast.
    tpc = jnp.repeat(temperature.reshape(num_heads).astype(jnp.float32),
                     ch).reshape(1, C)

    qkv_spec = pl.BlockSpec((1, thw, 3 * C), lambda b, t: (b, t, 0))

    # Pass 1: norms + Gram accumulation over hw tiles -> block-diagonal softmax.
    attn = pl.pallas_call(
        functools.partial(_attn_stats_kernel, C=C, ch=ch),
        out_shape=jax.ShapeDtypeStruct((B, C, C), jnp.float32),
        grid_spec=pltpu.PrefetchScalarGridSpec(
            num_scalar_prefetch=0,
            grid=(B, n_hw),
            in_specs=[qkv_spec,
                      pl.BlockSpec((1, C), lambda b, t: (0, 0))],
            out_specs=pl.BlockSpec((1, C, C), lambda b, t: (b, 0, 0)),
            scratch_shapes=[pltpu.VMEM((C, C), jnp.float32),
                            pltpu.VMEM((1, C), jnp.float32),
                            pltpu.VMEM((1, C), jnp.float32)],
        ),
        compiler_params=pltpu.CompilerParams(
            dimension_semantics=("parallel", "arbitrary"),
            vmem_limit_bytes=_VMEM_LIMIT),
    )(qkv, tpc)

    # Pass 2: apply attention to v, hw-tiled, lane-dense [B, HW, C] output.
    out = pl.pallas_call(
        functools.partial(_attn_apply_kernel, C=C),
        out_shape=jax.ShapeDtypeStruct((B, HWp, C), qkv.dtype),
        grid_spec=pltpu.PrefetchScalarGridSpec(
            num_scalar_prefetch=0,
            grid=(B, n_hw),
            in_specs=[qkv_spec,
                      pl.BlockSpec((1, C, C), lambda b, t: (b, 0, 0))],
            out_specs=pl.BlockSpec((1, thw, C), lambda b, t: (b, t, 0)),
        ),
        compiler_params=pltpu.CompilerParams(
            dimension_semantics=("parallel", "parallel"),
            vmem_limit_bytes=_VMEM_LIMIT),
    )(qkv, attn)

    if HWp != HW:
        out = out[:, :HW, :]
    return out


# ---------------------------------------------------------------------------
# QAttention module: params + forward (matches the PyTorch forward semantics)
# ---------------------------------------------------------------------------
def make_qattention_params(key, dim, num_heads):
    assert dim % num_heads == 0 and dim % 4 == 0
    k1, k2, k3 = jax.random.split(key, 3)
    # spectral_normed=False for all three convs in QAttention -> no Qspectral_norm.
    return {
        "num_heads": num_heads,
        "temperature": jnp.ones((num_heads, 1, 1), jnp.float32),
        "qkv": _make_qconv_params(k1, dim, dim * 3, 1),
        "qkv_dwconv": _make_qconv_params(k2, dim * 3, dim * 3, 3),
        "project_out": _make_qconv_params(k3, dim, dim, 1),
    }


def qattention_forward(params, x, hw_block=2048):
    """x: [B, C, H, W] (NCHW like PyTorch). Returns [B, C, H, W] (float32)."""
    B, C, H, W = x.shape
    nh = params["num_heads"]

    x_nhwc = jnp.transpose(x, (0, 2, 3, 1))
    qkv = qconv_apply(params["qkv"], x_nhwc)            # [B,H,W,3C] bf16
    qkv = qconv_apply(params["qkv_dwconv"], qkv)        # [B,H,W,3C] bf16
    qkv = qkv.reshape(B, H * W, 3 * C)                  # channel-last slab, no copy

    out = pallas_channel_attention(qkv, params["temperature"], nh,
                                   hw_block=hw_block)   # [B, HW, C] bf16
    out = out.reshape(B, H, W, C)                       # feeds project_out directly
    out = qconv_apply(params["project_out"], out, out_dtype=jnp.float32)
    return jnp.transpose(out, (0, 3, 1, 2))


# ---------------------------------------------------------------------------
# Pure-JAX f32 reference (original math, no Pallas) for the correctness check
# ---------------------------------------------------------------------------
def qattention_reference(params, x):
    B, C, H, W = x.shape
    nh = params["num_heads"]
    ch = C // nh

    def conv_ref(p, t):
        Bt, Ht, Wt, _ = t.shape
        cols = _im2col(t.astype(jnp.float32), p["ksize"])
        o = cols @ p["w_t"].astype(jnp.float32) + p["bias"]
        return o.reshape(Bt, Ht, Wt, -1)

    x_nhwc = jnp.transpose(x, (0, 2, 3, 1))
    qkv = conv_ref(params["qkv_dwconv"], conv_ref(params["qkv"], x_nhwc))
    q, k, v = jnp.split(qkv, 3, axis=-1)

    def to_heads(t):   # 'b (head c) h w -> b head c (h w)'
        return jnp.transpose(t, (0, 3, 1, 2)).reshape(B, nh, ch, H * W)

    q, k, v = to_heads(q), to_heads(k), to_heads(v)

    def l2n(t):
        n = jnp.sqrt(jnp.sum(t * t, axis=-1, keepdims=True))
        return t / jnp.maximum(n, 1e-12)

    q, k = l2n(q), l2n(k)
    attn = jnp.einsum('bhce,bhde->bhcd', q, k) * params["temperature"].reshape(1, nh, 1, 1)
    attn = jax.nn.softmax(attn, axis=-1)
    out = jnp.einsum('bhcd,bhde->bhce', attn, v)
    out = out.reshape(B, C, H, W)                       # 'b head c (h w) -> b (head c) h w'
    out = conv_ref(params["project_out"], jnp.transpose(out, (0, 2, 3, 1)))
    return jnp.transpose(out, (0, 3, 1, 2))


# ---------------------------------------------------------------------------
if __name__ == "__main__":
    key = jax.random.PRNGKey(0)
    k_x, k_p = jax.random.split(key)

    batch, dim, num_heads, h, w = 2, 32, 4, 16, 16
    x = jax.random.normal(k_x, (batch, dim, h, w), jnp.float32)
    params = make_qattention_params(k_p, dim, num_heads)

    ref = qattention_reference(params, x)
    scale = float(jnp.max(jnp.abs(ref))) + 1e-8

    # Run once with the default hw block (single hw tile here) and once with a
    # small hw block so the multi-tile accumulation path is exercised too.
    for blk in (2048, 64):
        out = qattention_forward(params, x, hw_block=blk)
        out = jax.block_until_ready(out)
        assert out.shape == (batch, dim, h, w), out.shape
        assert jnp.all(jnp.isfinite(out))
        err = float(jnp.max(jnp.abs(out.astype(jnp.float32) - ref)))
        # bf16 MXU operands (f32 accumulation) vs the pure-f32 reference.
        assert err / scale < 5e-2, (blk, err, scale)

    print("KERNEL_OK")
</pallas_src>

<mosaic_0001>
module attributes {stable_mosaic.version = 11 : i64} {
  func.func @_matmul_bias_kernel_single(%arg0: i32, %arg1: i32, %arg2: memref<512x32xbf16, #tpu.memory_space<vmem>>, %arg3: memref<32x128xbf16, #tpu.memory_space<vmem>>, %arg4: memref<1x128xf32, #tpu.memory_space<vmem>>, %arg5: memref<512x128xbf16, #tpu.memory_space<vmem>>) attributes {dimension_semantics = [#tpu.dimension_semantics<parallel>, #tpu.dimension_semantics<parallel>], iteration_bounds = array<i64: 1, 1>, scalar_prefetch = 0 : i64, scratch_operands = 0 : i64, tpu.core_type = #tpu.core_type<tc>, window_params = [{transform_indices = @transform_0, window_bounds = array<i64: 512, 32>}, {transform_indices = @transform_1, window_bounds = array<i64: 32, 128>}, {transform_indices = @transform_2, window_bounds = array<i64: 1, 128>}, {transform_indices = @transform_3, window_bounds = array<i64: 512, 128>}]} {
    %c0 = arith.constant 0 : index
    %c0_0 = arith.constant 0 : index
    %0 = vector.load %arg2[%c0, %c0_0] : memref<512x32xbf16, #tpu.memory_space<vmem>>, vector<512x32xbf16>
    %c0_1 = arith.constant 0 : index
    %c0_2 = arith.constant 0 : index
    %1 = vector.load %arg3[%c0_1, %c0_2] : memref<32x128xbf16, #tpu.memory_space<vmem>>, vector<32x128xbf16>
    %cst = arith.constant dense<0.000000e+00> : vector<512x128xf32>
    %2 = tpu.matmul %0, %1, %cst {dimension_numbers = #tpu.dot_dimension_numbers<[1], [0], [0], [1], [0, 0, 1, 1], [], []>} : vector<512x32xbf16>, vector<32x128xbf16>, vector<512x128xf32> -> vector<512x128xf32>
    %c0_3 = arith.constant 0 : index
    %c0_4 = arith.constant 0 : index
    %3 = vector.load %arg4[%c0_3, %c0_4] : memref<1x128xf32, #tpu.memory_space<vmem>>, vector<1x128xf32>
    %4 = vector.broadcast %3 : vector<1x128xf32> to vector<512x128xf32>
    %5 = arith.addf %2, %4 : vector<512x128xf32>
    %6 = arith.truncf %5 : vector<512x128xf32> to vector<512x128xbf16>
    %c0_5 = arith.constant 0 : index
    %c0_6 = arith.constant 0 : index
    %7 = vector.load %arg5[%c0_5, %c0_6] : memref<512x128xbf16, #tpu.memory_space<vmem>>, vector<512x128xbf16>
    tpu.vector_store %arg5[%c0_5, %c0_6], %6 {strides = array<i32>} : memref<512x128xbf16, #tpu.memory_space<vmem>>, vector<512x128xbf16>,
    return
  }
  func.func @transform_0(%arg0: i32, %arg1: i32) -> (i32, i32) {
    %c0_i32 = arith.constant 0 : i32
    %c0_i32_0 = arith.constant 0 : i32
    return %arg0, %c0_i32 : i32, i32
  }
  func.func @transform_1(%arg0: i32, %arg1: i32) -> (i32, i32) {
    %c0_i32 = arith.constant 0 : i32
    %c0_i32_0 = arith.constant 0 : i32
    return %c0_i32, %arg1 : i32, i32
  }
  func.func @transform_2(%arg0: i32, %arg1: i32) -> (i32, i32) {
    %c0_i32 = arith.constant 0 : i32
    %c0_i32_0 = arith.constant 0 : i32
    return %c0_i32, %arg1 : i32, i32
  }
  func.func @transform_3(%arg0: i32, %arg1: i32) -> (i32, i32) {
    %c0_i32 = arith.constant 0 : i32
    return %arg0, %arg1 : i32, i32
  }
}

</mosaic_0001>

<llo_original>
// kernel: tpu_custom_call.1
$region0: #{tpu_custom_call.1}
  #allocation0 [shape = 'u32[]', space=smem, size = 0x4, offset = 0x4, fixed_abs, tag = 'smem constant byte address 0x4 - core index']
  #allocation1 [shape = 'u32[144,128]{1,0:T(1,128)}', space=vmem, size = 0x12000, scoped, tag = 'internal scratch']
  %s0 = inlined_call_operand.vmem [shape: bf16[512,32], index: 0, kind: input, shape index: {}]
  %s1 = inlined_call_operand.vmem [shape: bf16[32,128], index: 1, kind: input, shape index: {}]
  %s2 = inlined_call_operand.vmem [shape: f32[1,128], index: 2, kind: input, shape index: {}]
  %s3 = inlined_call_operand.hbm [shape: bf16[512,128], index: 3, kind: output, shape index: {}]
  %s4 = sld [smem:[#allocation0]]
  $region22: #{tpu_custom_call.1} parent=0
    _
  %s6 = ssub.s32 1, %s4
  %s7 = scalar_select 0, %s6, %s4
  $region1: #{tpu_custom_call.1} parent=0
    #allocation2 [shape = 'u8[131072]{0}', space=vmem, size = 0x20000, scoped, tag = 'output window, operand 0, single buffered']
    #allocation3 [shape = 's32[1]{0}', space=sflag, size = 0x4, scoped, tag = 'scoped memory for tpu_custom_call.1']
    %8 = vsyncpa [#allocation3], 0
    // Predicated region
    $region2: #{tpu_custom_call.1} parent=1 // pred_check
      _
    $region3: #{tpu_custom_call.1} parent=1 // pred_check_branch
      %10 = sbr.rel (0) target = $region5
    $region4: #{tpu_custom_call.1} parent=1 // pred_region
      _
    $region5: #{tpu_custom_call.1} parent=1 // pred_fallthru
      _
    // Predicated region
    $region6: #{tpu_custom_call.1} parent=1 // pred_check
      _
    $region7: #{tpu_custom_call.1} parent=1 // pred_check_branch
      %12 = sbr.rel (0) target = $region9
    $region8: #{tpu_custom_call.1} parent=1 // pred_region
      _
    $region9: #{tpu_custom_call.1} parent=1 // pred_fallthru
      _
    // Predicated region
    $region10: #{tpu_custom_call.1} parent=1 // pred_check
      _
    $region11: #{tpu_custom_call.1} parent=1 // pred_check_branch
      %14 = sbr.rel (0) target = $region13
    $region12: #{tpu_custom_call.1} parent=1 // pred_region
      _
    $region13: #{tpu_custom_call.1} parent=1 // pred_fallthru
      _
    %v16 = vld [vmem:[%s0] sm:$0xf]
    %v17 = vld [vmem:[%s0 + $0x4] sm:$0xf]
    %v18 = vld [vmem:[%s0 + $0x8] sm:$0xf]
    %v19 = vld [vmem:[%s0 + $0xc] sm:$0xf]
    %v20 = vld [vmem:[%s0 + $0x10] sm:$0xf]
    %v21 = vld [vmem:[%s0 + $0x14] sm:$0xf]
    %v22 = vld [vmem:[%s0 + $0x18] sm:$0xf]
    %v23 = vld [vmem:[%s0 + $0x1c] sm:$0xf]
    %v24 = vld [vmem:[%s0 + $0x20] sm:$0xf]
    %v25 = vld [vmem:[%s0 + $0x24] sm:$0xf]
    %v26 = vld [vmem:[%s0 + $0x28] sm:$0xf]
    %v27 = vld [vmem:[%s0 + $0x2c] sm:$0xf]
    %v28 = vld [vmem:[%s0 + $0x30] sm:$0xf]
    %v29 = vld [vmem:[%s0 + $0x34] sm:$0xf]
    %v30 = vld [vmem:[%s0 + $0x38] sm:$0xf]
    %v31 = vld [vmem:[%s0 + $0x3c] sm:$0xf]
    %v32 = vld [vmem:[%s0 + $0x40] sm:$0xf]
    %v33 = vld [vmem:[%s0 + $0x44] sm:$0xf]
    %v34 = vld [vmem:[%s0 + $0x48] sm:$0xf]
    %v35 = vld [vmem:[%s0 + $0x4c] sm:$0xf]
    %v36 = vld [vmem:[%s0 + $0x50] sm:$0xf]
    %v37 = vld [vmem:[%s0 + $0x54] sm:$0xf]
    %v38 = vld [vmem:[%s0 + $0x58] sm:$0xf]
    %v39 = vld [vmem:[%s0 + $0x5c] sm:$0xf]
    %v40 = vld [vmem:[%s0 + $0x60] sm:$0xf]
    %v41 = vld [vmem:[%s0 + $0x64] sm:$0xf]
    %v42 = vld [vmem:[%s0 + $0x68] sm:$0xf]
    %v43 = vld [vmem:[%s0 + $0x6c] sm:$0xf]
    %v44 = vld [vmem:[%s0 + $0x70] sm:$0xf]
    %v45 = vld [vmem:[%s0 + $0x74] sm:$0xf]
    %v46 = vld [vmem:[%s0 + $0x78] sm:$0xf]
    %v47 = vld [vmem:[%s0 + $0x7c] sm:$0xf]
    %v48 = vld [vmem:[%s0 + $0x80] sm:$0xf]
    %v49 = vld [vmem:[%s0 + $0x84] sm:$0xf]
    %v50 = vld [vmem:[%s0 + $0x88] sm:$0xf]
    %v51 = vld [vmem:[%s0 + $0x8c] sm:$0xf]
    %v52 = vld [vmem:[%s0 + $0x90] sm:$0xf]
    %v53 = vld [vmem:[%s0 + $0x94] sm:$0xf]
    %v54 = vld [vmem:[%s0 + $0x98] sm:$0xf]
    %v55 = vld [vmem:[%s0 + $0x9c] sm:$0xf]
    %v56 = vld [vmem:[%s0 + $0xa0] sm:$0xf]
    %v57 = vld [vmem:[%s0 + $0xa4] sm:$0xf]
    %v58 = vld [vmem:[%s0 + $0xa8] sm:$0xf]
    %v59 = vld [vmem:[%s0 + $0xac] sm:$0xf]
    %v60 = vld [vmem:[%s0 + $0xb0] sm:$0xf]
    %v61 = vld [vmem:[%s0 + $0xb4] sm:$0xf]
    %v62 = vld [vmem:[%s0 + $0xb8] sm:$0xf]
    %v63 = vld [vmem:[%s0 + $0xbc] sm:$0xf]
    %v64 = vld [vmem:[%s0 + $0xc0] sm:$0xf]
    %v65 = vld [vmem:[%s0 + $0xc4] sm:$0xf]
    %v66 = vld [vmem:[%s0 + $0xc8] sm:$0xf]
    %v67 = vld [vmem:[%s0 + $0xcc] sm:$0xf]
    %v68 = vld [vmem:[%s0 + $0xd0] sm:$0xf]
    %v69 = vld [vmem:[%s0 + $0xd4] sm:$0xf]
    %v70 = vld [vmem:[%s0 + $0xd8] sm:$0xf]
    %v71 = vld [vmem:[%s0 + $0xdc] sm:$0xf]
    %v72 = vld [vmem:[%s0 + $0xe0] sm:$0xf]
    %v73 = vld [vmem:[%s0 + $0xe4] sm:$0xf]
    %v74 = vld [vmem:[%s0 + $0xe8] sm:$0xf]
    %v75 = vld [vmem:[%s0 + $0xec] sm:$0xf]
    %v76 = vld [vmem:[%s0 + $0xf0] sm:$0xf]
    %v77 = vld [vmem:[%s0 + $0xf4] sm:$0xf]
    %v78 = vld [vmem:[%s0 + $0xf8] sm:$0xf]
    %v79 = vld [vmem:[%s0 + $0xfc] sm:$0xf]
    %v80 = vld [vmem:[%s1] sm:$0xf]
    %v81 = vld [vmem:[%s1 + $0x4] sm:$0xf]
    %v82 = vld [vmem:[%s1 + $0x8] sm:$0xf]
    %v83 = vld [vmem:[%s1 + $0xc] sm:$0xf]
    %v84 = vld [vmem:[%s2] sm:$0x1]
    %v86 = vlaneseq
    %v87 = vshrl.u32 %v86, 7
    %v88 = vsub.s32 0, %v87
    %v89 = vrot.slane %v84, %v88
    %v155 = vunpack.c.l.b16 %v16
    %v156 = vunpack.c.l.b16 %v17
    %v157 = vunpack.c.l.b16 %v18
    %v158 = vunpack.c.l.b16 %v19
    %v159 = vunpack.c.l.b16 %v20
    %v160 = vunpack.c.l.b16 %v21
    %v161 = vunpack.c.l.b16 %v22
    %v162 = vunpack.c.l.b16 %v23
    %v163 = vunpack.c.l.b16 %v24
    %v164 = vunpack.c.l.b16 %v25
    %v165 = vunpack.c.l.b16 %v26
    %v166 = vunpack.c.l.b16 %v27
    %v167 = vunpack.c.l.b16 %v28
    %v168 = vunpack.c.l.b16 %v29
    %v169 = vunpack.c.l.b16 %v30
    %v170 = vunpack.c.l.b16 %v31
    %v171 = vunpack.c.l.b16 %v32
    %v172 = vunpack.c.l.b16 %v33
    %v173 = vunpack.c.l.b16 %v34
    %v174 = vunpack.c.l.b16 %v35
    %v175 = vunpack.c.l.b16 %v36
    %v176 = vunpack.c.l.b16 %v37
    %v177 = vunpack.c.l.b16 %v38
    %v178 = vunpack.c.l.b16 %v39
    %v179 = vunpack.c.l.b16 %v40
    %v180 = vunpack.c.l.b16 %v41
    %v181 = vunpack.c.l.b16 %v42
    %v182 = vunpack.c.l.b16 %v43
    %v183 = vunpack.c.l.b16 %v44
    %v184 = vunpack.c.l.b16 %v45
    %v185 = vunpack.c.l.b16 %v46
    %v186 = vunpack.c.l.b16 %v47
    %v187 = vunpack.c.l.b16 %v48
    %v188 = vunpack.c.l.b16 %v49
    %v189 = vunpack.c.l.b16 %v50
    %v190 = vunpack.c.l.b16 %v51
    %v191 = vunpack.c.l.b16 %v52
    %v192 = vunpack.c.l.b16 %v53
    %v193 = vunpack.c.l.b16 %v54
    %v194 = vunpack.c.l.b16 %v55
    %v195 = vunpack.c.l.b16 %v56
    %v196 = vunpack.c.l.b16 %v57
    %v197 = vunpack.c.l.b16 %v58
    %v198 = vunpack.c.l.b16 %v59
    %v199 = vunpack.c.l.b16 %v60
    %v200 = vunpack.c.l.b16 %v61
    %v201 = vunpack.c.l.b16 %v62
    %v202 = vunpack.c.l.b16 %v63
    %v203 = vunpack.c.l.b16 %v64
    %v204 = vunpack.c.l.b16 %v65
    %v205 = vunpack.c.l.b16 %v66
    %v206 = vunpack.c.l.b16 %v67
    %v207 = vunpack.c.l.b16 %v68
    %v208 = vunpack.c.l.b16 %v69
    %v209 = vunpack.c.l.b16 %v70
    %v210 = vunpack.c.l.b16 %v71
    %v211 = vunpack.c.l.b16 %v72
    %v212 = vunpack.c.l.b16 %v73
    %v213 = vunpack.c.l.b16 %v74
    %v214 = vunpack.c.l.b16 %v75
    %v215 = vunpack.c.l.b16 %v76
    %v216 = vunpack.c.l.b16 %v77
    %v217 = vunpack.c.l.b16 %v78
    %v218 = vunpack.c.l.b16 %v79
    %v219 = vpack.c.b16 %v156, %v155
    %v220 = vpack.c.b16 %v158, %v157
    %v221 = vpack.c.b16 %v160, %v159
    %v222 = vpack.c.b16 %v162, %v161
    %v223 = vpack.c.b16 %v164, %v163
    %v224 = vpack.c.b16 %v166, %v165
    %v225 = vpack.c.b16 %v168, %v167
    %v226 = vpack.c.b16 %v170, %v169
    %v227 = vpack.c.b16 %v172, %v171
    %v228 = vpack.c.b16 %v174, %v173
    %v229 = vpack.c.b16 %v176, %v175
    %v230 = vpack.c.b16 %v178, %v177
    %v231 = vpack.c.b16 %v180, %v179
    %v232 = vpack.c.b16 %v182, %v181
    %v233 = vpack.c.b16 %v184, %v183
    %v234 = vpack.c.b16 %v186, %v185
    %v235 = vpack.c.b16 %v188, %v187
    %v236 = vpack.c.b16 %v190, %v189
    %v237 = vpack.c.b16 %v192, %v191
    %v238 = vpack.c.b16 %v194, %v193
    %v239 = vpack.c.b16 %v196, %v195
    %v240 = vpack.c.b16 %v198, %v197
    %v241 = vpack.c.b16 %v200, %v199
    %v242 = vpack.c.b16 %v202, %v201
    %v243 = vpack.c.b16 %v204, %v203
    %v244 = vpack.c.b16 %v206, %v205
    %v245 = vpack.c.b16 %v208, %v207
    %v246 = vpack.c.b16 %v210, %v209
    %v247 = vpack.c.b16 %v212, %v211
    %v248 = vpack.c.b16 %v214, %v213
    %v249 = vpack.c.b16 %v216, %v215
    %v250 = vpack.c.b16 %v218, %v217
    %v255 = vunpack.c.l.b16 %v80
    %v256 = vunpack.c.l.b16 %v81
    %v257 = vunpack.c.l.b16 %v82
    %v258 = vunpack.c.l.b16 %v83
    %v259 = vpack.c.b16 %v256, %v255
    %v260 = vpack.c.b16 %v258, %v257
    %vm263 = vcmask 261120
    %v265 = vsel %vm263, %v219, 0
    %v268 = vsel %vm263, %v220, 0
    %v271 = vsel %vm263, %v221, 0
    %v274 = vsel %vm263, %v222, 0
    %v277 = vsel %vm263, %v223, 0
    %v280 = vsel %vm263, %v224, 0
    %v283 = vsel %vm263, %v225, 0
    %v286 = vsel %vm263, %v226, 0
    %v289 = vsel %vm263, %v227, 0
    %v292 = vsel %vm263, %v228, 0
    %v295 = vsel %vm263, %v229, 0
    %v298 = vsel %vm263, %v230, 0
    %v301 = vsel %vm263, %v231, 0
    %v304 = vsel %vm263, %v232, 0
    %v307 = vsel %vm263, %v233, 0
    %v310 = vsel %vm263, %v234, 0
    %v313 = vsel %vm263, %v235, 0
    %v316 = vsel %vm263, %v236, 0
    %v319 = vsel %vm263, %v237, 0
    %v322 = vsel %vm263, %v238, 0
    %v325 = vsel %vm263, %v239, 0
    %v328 = vsel %vm263, %v240, 0
    %v331 = vsel %vm263, %v241, 0
    %v334 = vsel %vm263, %v242, 0
    %v337 = vsel %vm263, %v243, 0
    %v340 = vsel %vm263, %v244, 0
    %v343 = vsel %vm263, %v245, 0
    %v346 = vsel %vm263, %v246, 0
    %v349 = vsel %vm263, %v247, 0
    %v352 = vsel %vm263, %v248, 0
    %v355 = vsel %vm263, %v249, 0
    %v358 = vsel %vm263, %v250, 0
    %360 = vmatprep.subr.bf16.mxu0 0
    %361 = vmatpush1.bf16.msra.mxu0 %v259
    %362 = vmatprep.subr.bf16.mxu0 0
    %363 = vmatpush1.bf16.msra.mxu0 %v260
    %364 = vmatprep.subr.bf16.mxu0 0
    %365 = vmatpush1.bf16.msra.mxu0 0
    %366 = vmatprep.subr.bf16.mxu0 0
    %367 = vmatpush1.bf16.msra.mxu0 0
    %368 = vmatprep.subr.bf16.mxu0 0
    %369 = vmatpush1.bf16.msra.mxu0 0
    %370 = vmatprep.subr.bf16.mxu0 0
    %371 = vmatpush1.bf16.msra.mxu0 0
    %372 = vmatprep.subr.bf16.mxu0 0
    %373 = vmatpush1.bf16.msra.mxu0 0
    %374 = vmatprep.subr.bf16.mxu0 0
    %375 = vmatpush1.bf16.msra.mxu0 0
    %376 = vmatprep.subr.bf16.mxu0 0
    %377 = vmatpush1.bf16.msra.mxu0 0
    %378 = vmatprep.subr.bf16.mxu0 0
    %379 = vmatpush1.bf16.msra.mxu0 0
    %380 = vmatprep.subr.bf16.mxu0 0
    %381 = vmatpush1.bf16.msra.mxu0 0
    %382 = vmatprep.subr.bf16.mxu0 0
    %383 = vmatpush1.bf16.msra.mxu0 0
    %384 = vmatprep.subr.bf16.mxu0 0
    %385 = vmatpush1.bf16.msra.mxu0 0
    %386 = vmatprep.subr.bf16.mxu0 0
    %387 = vmatpush1.bf16.msra.mxu0 0
    %388 = vmatprep.subr.bf16.mxu0 0
    %389 = vmatpush1.bf16.msra.mxu0 0
    %390 = vmatprep.subr.bf16.mxu0 0
    %391 = vmatpush1.bf16.msra.mxu0 0
    %392 = vmatprep.mubr.bf16.mxu0 0
    %393 = vmatmul.mubr.bf16.gmra.mrb[0].mxu0 %v265
    %v394 = vpop.f32.mrb[0].mxu0
    %v395 = vadd.f32 %v89, %v394
    %v396 = vpop.f32.mrb[0].mxu0
    %v397 = vpop.f32.mrb[0].mxu0
    %v398 = vadd.f32 %v89, %v397
    %v399 = vpop.f32.mrb[0].mxu0
    %400 = vmatprep.mubr.bf16.mxu0 0
    %401 = vmatmul.mubr.bf16.gmra.mrb[0].mxu0 %v268
    %v402 = vpop.f32.mrb[0].mxu0
    %v403 = vadd.f32 %v89, %v402
    %v404 = vpop.f32.mrb[0].mxu0
    %v405 = vpop.f32.mrb[0].mxu0
    %v406 = vadd.f32 %v89, %v405
    %v407 = vpop.f32.mrb[0].mxu0
    %408 = vmatprep.mubr.bf16.mxu0 0
    %409 = vmatmul.mubr.bf16.gmra.mrb[0].mxu0 %v271
    %v410 = vpop.f32.mrb[0].mxu0
    %v411 = vadd.f32 %v89, %v410
    %v412 = vpop.f32.mrb[0].mxu0
    %v413 = vpop.f32.mrb[0].mxu0
    %v414 = vadd.f32 %v89, %v413
    %v415 = vpop.f32.mrb[0].mxu0
    %416 = vmatprep.mubr.bf16.mxu0 0
    %417 = vmatmul.mubr.bf16.gmra.mrb[0].mxu0 %v274
    %v418 = vpop.f32.mrb[0].mxu0
    %v419 = vadd.f32 %v89, %v418
    %v420 = vpop.f32.mrb[0].mxu0
    %v421 = vpop.f32.mrb[0].mxu0
    %v422 = vadd.f32 %v89, %v421
    %v423 = vpop.f32.mrb[0].mxu0
    %424 = vmatprep.mubr.bf16.mxu0 0
    %425 = vmatmul.mubr.bf16.gmra.mrb[0].mxu0 %v277
    %v426 = vpop.f32.mrb[0].mxu0
    %v427 = vadd.f32 %v89, %v426
    %v428 = vpop.f32.mrb[0].mxu0
    %v429 = vpop.f32.mrb[0].mxu0
    %v430 = vadd.f32 %v89, %v429
    %v431 = vpop.f32.mrb[0].mxu0
    %432 = vmatprep.mubr.bf16.mxu0 0
    %433 = vmatmul.mubr.bf16.gmra.mrb[0].mxu0 %v280
    %v434 = vpop.f32.mrb[0].mxu0
    %v435 = vadd.f32 %v89, %v434
    %v436 = vpop.f32.mrb[0].mxu0
    %v437 = vpop.f32.mrb[0].mxu0
    %v438 = vadd.f32 %v89, %v437
    %v439 = vpop.f32.mrb[0].mxu0
    %440 = vmatprep.mubr.bf16.mxu0 0
    %441 = vmatmul.mubr.bf16.gmra.mrb[0].mxu0 %v283
    %v442 = vpop.f32.mrb[0].mxu0
    %v443 = vadd.f32 %v89, %v442
    %v444 = vpop.f32.mrb[0].mxu0
    %v445 = vpop.f32.mrb[0].mxu0
    %v446 = vadd.f32 %v89, %v445
    %v447 = vpop.f32.mrb[0].mxu0
    %448 = vmatprep.mubr.bf16.mxu0 0
    %449 = vmatmul.mubr.bf16.gmra.mrb[0].mxu0 %v286
    %v450 = vpop.f32.mrb[0].mxu0
    %v451 = vadd.f32 %v89, %v450
    %v452 = vpop.f32.mrb[0].mxu0
    %v453 = vpop.f32.mrb[0].mxu0
    %v454 = vadd.f32 %v89, %v453
    %v455 = vpop.f32.mrb[0].mxu0
    %456 = vmatprep.mubr.bf16.mxu0 0
    %457 = vmatmul.mubr.bf16.gmra.mrb[0].mxu0 %v289
    %v458 = vpop.f32.mrb[0].mxu0
    %v459 = vadd.f32 %v89, %v458
    %v460 = vpop.f32.mrb[0].mxu0
    %v461 = vpop.f32.mrb[0].mxu0
    %v462 = vadd.f32 %v89, %v461
    %v463 = vpop.f32.mrb[0].mxu0
    %464 = vmatprep.mubr.bf16.mxu0 0
    %465 = vmatmul.mubr.bf16.gmra.mrb[0].mxu0 %v292
    %v466 = vpop.f32.mrb[0].mxu0
    %v467 = vadd.f32 %v89, %v466
    %v468 = vpop.f32.mrb[0].mxu0
    %v469 = vpop.f32.mrb[0].mxu0
    %v470 = vadd.f32 %v89, %v469
    %v471 = vpop.f32.mrb[0].mxu0
    %472 = vmatprep.mubr.bf16.mxu0 0
    %473 = vmatmul.mubr.bf16.gmra.mrb[0].mxu0 %v295
    %v474 = vpop.f32.mrb[0].mxu0
    %v475 = vadd.f32 %v89, %v474
    %v476 = vpop.f32.mrb[0].mxu0
    %v477 = vpop.f32.mrb[0].mxu0
    %v478 = vadd.f32 %v89, %v477
    %v479 = vpop.f32.mrb[0].mxu0
    %480 = vmatprep.mubr.bf16.mxu0 0
    %481 = vmatmul.mubr.bf16.gmra.mrb[0].mxu0 %v298
    %v482 = vpop.f32.mrb[0].mxu0
    %v483 = vadd.f32 %v89, %v482
    %v484 = vpop.f32.mrb[0].mxu0
    %v485 = vpop.f32.mrb[0].mxu0
    %v486 = vadd.f32 %v89, %v485
    %v487 = vpop.f32.mrb[0].mxu0
    %488 = vmatprep.mubr.bf16.mxu0 0
    %489 = vmatmul.mubr.bf16.gmra.mrb[0].mxu0 %v301
    %v490 = vpop.f32.mrb[0].mxu0
    %v491 = vadd.f32 %v89, %v490
    %v492 = vpop.f32.mrb[0].mxu0
    %v493 = vpop.f32.mrb[0].mxu0
    %v494 = vadd.f32 %v89, %v493
    %v495 = vpop.f32.mrb[0].mxu0
    %496 = vmatprep.mubr.bf16.mxu0 0
    %497 = vmatmul.mubr.bf16.gmra.mrb[0].mxu0 %v304
    %v498 = vpop.f32.mrb[0].mxu0
    %v499 = vadd.f32 %v89, %v498
    %v500 = vpop.f32.mrb[0].mxu0
    %v501 = vpop.f32.mrb[0].mxu0
    %v502 = vadd.f32 %v89, %v501
    %v503 = vpop.f32.mrb[0].mxu0
    %504 = vmatprep.mubr.bf16.mxu0 0
    %505 = vmatmul.mubr.bf16.gmra.mrb[0].mxu0 %v307
    %v506 = vpop.f32.mrb[0].mxu0
    %v507 = vadd.f32 %v89, %v506
    %v508 = vpop.f32.mrb[0].mxu0
    %v509 = vpop.f32.mrb[0].mxu0
    %v510 = vadd.f32 %v89, %v509
    %v511 = vpop.f32.mrb[0].mxu0
    %512 = vmatprep.mubr.bf16.mxu0 0
    %513 = vmatmul.mubr.bf16.gmra.mrb[0].mxu0 %v310
    %v514 = vpop.f32.mrb[0].mxu0
    %v515 = vadd.f32 %v89, %v514
    %v516 = vpop.f32.mrb[0].mxu0
    %v517 = vpop.f32.mrb[0].mxu0
    %v518 = vadd.f32 %v89, %v517
    %v519 = vpop.f32.mrb[0].mxu0
    %520 = vmatprep.mubr.bf16.mxu0 0
    %521 = vmatmul.mubr.bf16.gmra.mrb[0].mxu0 %v313
    %v522 = vpop.f32.mrb[0].mxu0
    %v523 = vadd.f32 %v89, %v522
    %v524 = vpop.f32.mrb[0].mxu0
    %v525 = vpop.f32.mrb[0].mxu0
    %v526 = vadd.f32 %v89, %v525
    %v527 = vpop.f32.mrb[0].mxu0
    %528 = vmatprep.mubr.bf16.mxu0 0
    %529 = vmatmul.mubr.bf16.gmra.mrb[0].mxu0 %v316
    %v530 = vpop.f32.mrb[0].mxu0
    %v531 = vadd.f32 %v89, %v530
    %v532 = vpop.f32.mrb[0].mxu0
    %v533 = vpop.f32.mrb[0].mxu0
    %v534 = vadd.f32 %v89, %v533
    %v535 = vpop.f32.mrb[0].mxu0
    %536 = vmatprep.mubr.bf16.mxu0 0
    %537 = vmatmul.mubr.bf16.gmra.mrb[0].mxu0 %v319
    %v538 = vpop.f32.mrb[0].mxu0
    %v539 = vadd.f32 %v89, %v538
    %v540 = vpop.f32.mrb[0].mxu0
    %v541 = vpop.f32.mrb[0].mxu0
    %v542 = vadd.f32 %v89, %v541
    %v543 = vpop.f32.mrb[0].mxu0
    %544 = vmatprep.mubr.bf16.mxu0 0
    %545 = vmatmul.mubr.bf16.gmra.mrb[0].mxu0 %v322
    %v546 = vpop.f32.mrb[0].mxu0
    %v547 = vadd.f32 %v89, %v546
    %v548 = vpop.f32.mrb[0].mxu0
    %v549 = vpop.f32.mrb[0].mxu0
    %v550 = vadd.f32 %v89, %v549
    %v551 = vpop.f32.mrb[0].mxu0
    %552 = vmatprep.mubr.bf16.mxu0 0
    %553 = vmatmul.mubr.bf16.gmra.mrb[0].mxu0 %v325
    %v554 = vpop.f32.mrb[0].mxu0
    %v555 = vadd.f32 %v89, %v554
    %v556 = vpop.f32.mrb[0].mxu0
    %v557 = vpop.f32.mrb[0].mxu0
    %v558 = vadd.f32 %v89, %v557
    %v559 = vpop.f32.mrb[0].mxu0
    %560 = vmatprep.mubr.bf16.mxu0 0
    %561 = vmatmul.mubr.bf16.gmra.mrb[0].mxu0 %v328
    %v562 = vpop.f32.mrb[0].mxu0
    %v563 = vadd.f32 %v89, %v562
    %v564 = vpop.f32.mrb[0].mxu0
    %v565 = vpop.f32.mrb[0].mxu0
    %v566 = vadd.f32 %v89, %v565
    %v567 = vpop.f32.mrb[0].mxu0
    %568 = vmatprep.mubr.bf16.mxu0 0
    %569 = vmatmul.mubr.bf16.gmra.mrb[0].mxu0 %v331
    %v570 = vpop.f32.mrb[0].mxu0
    %v571 = vadd.f32 %v89, %v570
    %v572 = vpop.f32.mrb[0].mxu0
    %v573 = vpop.f32.mrb[0].mxu0
    %v574 = vadd.f32 %v89, %v573
    %v575 = vpop.f32.mrb[0].mxu0
    %576 = vmatprep.mubr.bf16.mxu0 0
    %577 = vmatmul.mubr.bf16.gmra.mrb[0].mxu0 %v334
    %v578 = vpop.f32.mrb[0].mxu0
    %v579 = vadd.f32 %v89, %v578
    %v580 = vpop.f32.mrb[0].mxu0
    %v581 = vpop.f32.mrb[0].mxu0
    %v582 = vadd.f32 %v89, %v581
    %v583 = vpop.f32.mrb[0].mxu0
    %584 = vmatprep.mubr.bf16.mxu0 0
    %585 = vmatmul.mubr.bf16.gmra.mrb[0].mxu0 %v337
    %v586 = vpop.f32.mrb[0].mxu0
    %v587 = vadd.f32 %v89, %v586
    %v588 = vpop.f32.mrb[0].mxu0
    %v589 = vpop.f32.mrb[0].mxu0
    %v590 = vadd.f32 %v89, %v589
    %v591 = vpop.f32.mrb[0].mxu0
    %592 = vmatprep.mubr.bf16.mxu0 0
    %593 = vmatmul.mubr.bf16.gmra.mrb[0].mxu0 %v340
    %v594 = vpop.f32.mrb[0].mxu0
    %v595 = vadd.f32 %v89, %v594
    %v596 = vpop.f32.mrb[0].mxu0
    %v597 = vpop.f32.mrb[0].mxu0
    %v598 = vadd.f32 %v89, %v597
    %v599 = vpop.f32.mrb[0].mxu0
    %600 = vmatprep.mubr.bf16.mxu0 0
    %601 = vmatmul.mubr.bf16.gmra.mrb[0].mxu0 %v343
    %v602 = vpop.f32.mrb[0].mxu0
    %v603 = vadd.f32 %v89, %v602
    %v604 = vpop.f32.mrb[0].mxu0
    %v605 = vpop.f32.mrb[0].mxu0
    %v606 = vadd.f32 %v89, %v605
    %v607 = vpop.f32.mrb[0].mxu0
    %608 = vmatprep.mubr.bf16.mxu0 0
    %609 = vmatmul.mubr.bf16.gmra.mrb[0].mxu0 %v346
    %v610 = vpop.f32.mrb[0].mxu0
    %v611 = vadd.f32 %v89, %v610
    %v612 = vpop.f32.mrb[0].mxu0
    %v613 = vpop.f32.mrb[0].mxu0
    %v614 = vadd.f32 %v89, %v613
    %v615 = vpop.f32.mrb[0].mxu0
    %616 = vmatprep.mubr.bf16.mxu0 0
    %617 = vmatmul.mubr.bf16.gmra.mrb[0].mxu0 %v349
    %v618 = vpop.f32.mrb[0].mxu0
    %v619 = vadd.f32 %v89, %v618
    %v620 = vpop.f32.mrb[0].mxu0
    %v621 = vpop.f32.mrb[0].mxu0
    %v622 = vadd.f32 %v89, %v621
    %v623 = vpop.f32.mrb[0].mxu0
    %624 = vmatprep.mubr.bf16.mxu0 0
    %625 = vmatmul.mubr.bf16.gmra.mrb[0].mxu0 %v352
    %v626 = vpop.f32.mrb[0].mxu0
    %v627 = vadd.f32 %v89, %v626
    %v628 = vpop.f32.mrb[0].mxu0
    %v629 = vpop.f32.mrb[0].mxu0
    %v630 = vadd.f32 %v89, %v629
    %v631 = vpop.f32.mrb[0].mxu0
    %632 = vmatprep.mubr.bf16.mxu0 0
    %633 = vmatmul.mubr.bf16.gmra.mrb[0].mxu0 %v355
    %v634 = vpop.f32.mrb[0].mxu0
    %v635 = vadd.f32 %v89, %v634
    %v636 = vpop.f32.mrb[0].mxu0
    %v637 = vpop.f32.mrb[0].mxu0
    %v638 = vadd.f32 %v89, %v637
    %v639 = vpop.f32.mrb[0].mxu0
    %640 = vmatprep.mubr.bf16.mxu0 0
    %641 = vmatmul.mubr.bf16.gmra.mrb[0].mxu0 %v358
    %v642 = vpop.f32.mrb[0].mxu0
    %v643 = vadd.f32 %v89, %v642
    %v644 = vpop.f32.mrb[0].mxu0
    %v645 = vpop.f32.mrb[0].mxu0
    %v646 = vadd.f32 %v89, %v645
    %v647 = vpop.f32.mrb[0].mxu0
    %648 = vdwg.mxu0
    %v649 = vpack.c.bf16 %v398, %v395
    %v650 = vpack.c.bf16 %v406, %v403
    %v651 = vpack.c.bf16 %v414, %v411
    %v652 = vpack.c.bf16 %v422, %v419
    %v653 = vpack.c.bf16 %v430, %v427
    %v654 = vpack.c.bf16 %v438, %v435
    %v655 = vpack.c.bf16 %v446, %v443
    %v656 = vpack.c.bf16 %v454, %v451
    %v657 = vpack.c.bf16 %v462, %v459
    %v658 = vpack.c.bf16 %v470, %v467
    %v659 = vpack.c.bf16 %v478, %v475
    %v660 = vpack.c.bf16 %v486, %v483
    %v661 = vpack.c.bf16 %v494, %v491
    %v662 = vpack.c.bf16 %v502, %v499
    %v663 = vpack.c.bf16 %v510, %v507
    %v664 = vpack.c.bf16 %v518, %v515
    %v665 = vpack.c.bf16 %v526, %v523
    %v666 = vpack.c.bf16 %v534, %v531
    %v667 = vpack.c.bf16 %v542, %v539
    %v668 = vpack.c.bf16 %v550, %v547
    %v669 = vpack.c.bf16 %v558, %v555
    %v670 = vpack.c.bf16 %v566, %v563
    %v671 = vpack.c.bf16 %v574, %v571
    %v672 = vpack.c.bf16 %v582, %v579
    %v673 = vpack.c.bf16 %v590, %v587
    %v674 = vpack.c.bf16 %v598, %v595
    %v675 = vpack.c.bf16 %v606, %v603
    %v676 = vpack.c.bf16 %v614, %v611
    %v677 = vpack.c.bf16 %v622, %v619
    %v678 = vpack.c.bf16 %v630, %v627
    %v679 = vpack.c.bf16 %v638, %v635
    %v680 = vpack.c.bf16 %v646, %v643
    %v713 = vunpack.c.l.b16 %v649
    %v714 = vunpack.c.h.b16 %v649
    %v715 = vunpack.c.l.b16 %v650
    %v716 = vunpack.c.h.b16 %v650
    %v717 = vunpack.c.l.b16 %v651
    %v718 = vunpack.c.h.b16 %v651
    %v719 = vunpack.c.l.b16 %v652
    %v720 = vunpack.c.h.b16 %v652
    %v721 = vunpack.c.l.b16 %v653
    %v722 = vunpack.c.h.b16 %v653
    %v723 = vunpack.c.l.b16 %v654
    %v724 = vunpack.c.h.b16 %v654
    %v725 = vunpack.c.l.b16 %v655
    %v726 = vunpack.c.h.b16 %v655
    %v727 = vunpack.c.l.b16 %v656
    %v728 = vunpack.c.h.b16 %v656
    %v729 = vunpack.c.l.b16 %v657
    %v730 = vunpack.c.h.b16 %v657
    %v731 = vunpack.c.l.b16 %v658
    %v732 = vunpack.c.h.b16 %v658
    %v733 = vunpack.c.l.b16 %v659
    %v734 = vunpack.c.h.b16 %v659
    %v735 = vunpack.c.l.b16 %v660
    %v736 = vunpack.c.h.b16 %v660
    %v737 = vunpack.c.l.b16 %v661
    %v738 = vunpack.c.h.b16 %v661
    %v739 = vunpack.c.l.b16 %v662
    %v740 = vunpack.c.h.b16 %v662
    %v741 = vunpack.c.l.b16 %v663
    %v742 = vunpack.c.h.b16 %v663
    %v743 = vunpack.c.l.b16 %v664
    %v744 = vunpack.c.h.b16 %v664
    %v745 = vunpack.c.l.b16 %v665
    %v746 = vunpack.c.h.b16 %v665
    %v747 = vunpack.c.l.b16 %v666
    %v748 = vunpack.c.h.b16 %v666
    %v749 = vunpack.c.l.b16 %v667
    %v750 = vunpack.c.h.b16 %v667
    %v751 = vunpack.c.l.b16 %v668
    %v752 = vunpack.c.h.b16 %v668
    %v753 = vunpack.c.l.b16 %v669
    %v754 = vunpack.c.h.b16 %v669
    %v755 = vunpack.c.l.b16 %v670
    %v756 = vunpack.c.h.b16 %v670
    %v757 = vunpack.c.l.b16 %v671
    %v758 = vunpack.c.h.b16 %v671
    %v759 = vunpack.c.l.b16 %v672
    %v760 = vunpack.c.h.b16 %v672
    %v761 = vunpack.c.l.b16 %v673
    %v762 = vunpack.c.h.b16 %v673
    %v763 = vunpack.c.l.b16 %v674
    %v764 = vunpack.c.h.b16 %v674
    %v765 = vunpack.c.l.b16 %v675
    %v766 = vunpack.c.h.b16 %v675
    %v767 = vunpack.c.l.b16 %v676
    %v768 = vunpack.c.h.b16 %v676
    %v769 = vunpack.c.l.b16 %v677
    %v770 = vunpack.c.h.b16 %v677
    %v771 = vunpack.c.l.b16 %v678
    %v772 = vunpack.c.h.b16 %v678
    %v773 = vunpack.c.l.b16 %v679
    %v774 = vunpack.c.h.b16 %v679
    %v775 = vunpack.c.l.b16 %v680
    %v776 = vunpack.c.h.b16 %v680
    %v777 = vpack.c.b16 %v713, %v713
    %v778 = vpack.c.b16 %v714, %v714
    %v779 = vpack.c.b16 %v715, %v715
    %v780 = vpack.c.b16 %v716, %v716
    %v781 = vpack.c.b16 %v717, %v717
    %v782 = vpack.c.b16 %v718, %v718
    %v783 = vpack.c.b16 %v719, %v719
    %v784 = vpack.c.b16 %v720, %v720
    %v785 = vpack.c.b16 %v721, %v721
    %v786 = vpack.c.b16 %v722, %v722
    %v787 = vpack.c.b16 %v723, %v723
    %v788 = vpack.c.b16 %v724, %v724
    %v789 = vpack.c.b16 %v725, %v725
    %v790 = vpack.c.b16 %v726, %v726
    %v791 = vpack.c.b16 %v727, %v727
    %v792 = vpack.c.b16 %v728, %v728
    %v793 = vpack.c.b16 %v729, %v729
    %v794 = vpack.c.b16 %v730, %v730
    %v795 = vpack.c.b16 %v731, %v731
    %v796 = vpack.c.b16 %v732, %v732
    %v797 = vpack.c.b16 %v733, %v733
    %v798 = vpack.c.b16 %v734, %v734
    %v799 = vpack.c.b16 %v735, %v735
    %v800 = vpack.c.b16 %v736, %v736
    %v801 = vpack.c.b16 %v737, %v737
    %v802 = vpack.c.b16 %v738, %v738
    %v803 = vpack.c.b16 %v739, %v739
    %v804 = vpack.c.b16 %v740, %v740
    %v805 = vpack.c.b16 %v741, %v741
    %v806 = vpack.c.b16 %v742, %v742
    %v807 = vpack.c.b16 %v743, %v743
    %v808 = vpack.c.b16 %v744, %v744
    %v809 = vpack.c.b16 %v745, %v745
    %v810 = vpack.c.b16 %v746, %v746
    %v811 = vpack.c.b16 %v747, %v747
    %v812 = vpack.c.b16 %v748, %v748
    %v813 = vpack.c.b16 %v749, %v749
    %v814 = vpack.c.b16 %v750, %v750
    %v815 = vpack.c.b16 %v751, %v751
    %v816 = vpack.c.b16 %v752, %v752
    %v817 = vpack.c.b16 %v753, %v753
    %v818 = vpack.c.b16 %v754, %v754
    %v819 = vpack.c.b16 %v755, %v755
    %v820 = vpack.c.b16 %v756, %v756
    %v821 = vpack.c.b16 %v757, %v757
    %v822 = vpack.c.b16 %v758, %v758
    %v823 = vpack.c.b16 %v759, %v759
    %v824 = vpack.c.b16 %v760, %v760
    %v825 = vpack.c.b16 %v761, %v761
    %v826 = vpack.c.b16 %v762, %v762
    %v827 = vpack.c.b16 %v763, %v763
    %v828 = vpack.c.b16 %v764, %v764
    %v829 = vpack.c.b16 %v765, %v765
    %v830 = vpack.c.b16 %v766, %v766
    %v831 = vpack.c.b16 %v767, %v767
    %v832 = vpack.c.b16 %v768, %v768
    %v833 = vpack.c.b16 %v769, %v769
    %v834 = vpack.c.b16 %v770, %v770
    %v835 = vpack.c.b16 %v771, %v771
    %v836 = vpack.c.b16 %v772, %v772
    %v837 = vpack.c.b16 %v773, %v773
    %v838 = vpack.c.b16 %v774, %v774
    %v839 = vpack.c.b16 %v775, %v775
    %v840 = vpack.c.b16 %v776, %v776
    %905 = vst [vmem:[#allocation2] sm:$0xf] %v777
    %906 = vst [vmem:[#allocation2 + $0x4] sm:$0xf] %v778
    %907 = vst [vmem:[#allocation2 + $0x8] sm:$0xf] %v779
    %908 = vst [vmem:[#allocation2 + $0xc] sm:$0xf] %v780
    %909 = vst [vmem:[#allocation2 + $0x10] sm:$0xf] %v781
    %910 = vst [vmem:[#allocation2 + $0x14] sm:$0xf] %v782
    %911 = vst [vmem:[#allocation2 + $0x18] sm:$0xf] %v783
    %912 = vst [vmem:[#allocation2 + $0x1c] sm:$0xf] %v784
    %913 = vst [vmem:[#allocation2 + $0x20] sm:$0xf] %v785
    %914 = vst [vmem:[#allocation2 + $0x24] sm:$0xf] %v786
    %915 = vst [vmem:[#allocation2 + $0x28] sm:$0xf] %v787
    %916 = vst [vmem:[#allocation2 + $0x2c] sm:$0xf] %v788
    %917 = vst [vmem:[#allocation2 + $0x30] sm:$0xf] %v789
    %918 = vst [vmem:[#allocation2 + $0x34] sm:$0xf] %v790
    %919 = vst [vmem:[#allocation2 + $0x38] sm:$0xf] %v791
    %920 = vst [vmem:[#allocation2 + $0x3c] sm:$0xf] %v792
    %921 = vst [vmem:[#allocation2 + $0x40] sm:$0xf] %v793
    %922 = vst [vmem:[#allocation2 + $0x44] sm:$0xf] %v794
    %923 = vst [vmem:[#allocation2 + $0x48] sm:$0xf] %v795
    %924 = vst [vmem:[#allocation2 + $0x4c] sm:$0xf] %v796
    %925 = vst [vmem:[#allocation2 + $0x50] sm:$0xf] %v797
    %926 = vst [vmem:[#allocation2 + $0x54] sm:$0xf] %v798
    %927 = vst [vmem:[#allocation2 + $0x58] sm:$0xf] %v799
    %928 = vst [vmem:[#allocation2 + $0x5c] sm:$0xf] %v800
    %929 = vst [vmem:[#allocation2 + $0x60] sm:$0xf] %v801
    %930 = vst [vmem:[#allocation2 + $0x64] sm:$0xf] %v802
    %931 = vst [vmem:[#allocation2 + $0x68] sm:$0xf] %v803
    %932 = vst [vmem:[#allocation2 + $0x6c] sm:$0xf] %v804
    %933 = vst [vmem:[#allocation2 + $0x70] sm:$0xf] %v805
    %934 = vst [vmem:[#allocation2 + $0x74] sm:$0xf] %v806
    %935 = vst [vmem:[#allocation2 + $0x78] sm:$0xf] %v807
    %936 = vst [vmem:[#allocation2 + $0x7c] sm:$0xf] %v808
    %937 = vst [vmem:[#allocation2 + $0x80] sm:$0xf] %v809
    %938 = vst [vmem:[#allocation2 + $0x84] sm:$0xf] %v810
    %939 = vst [vmem:[#allocation2 + $0x88] sm:$0xf] %v811
    %940 = vst [vmem:[#allocation2 + $0x8c] sm:$0xf] %v812
    %941 = vst [vmem:[#allocation2 + $0x90] sm:$0xf] %v813
    %942 = vst [vmem:[#allocation2 + $0x94] sm:$0xf] %v814
    %943 = vst [vmem:[#allocation2 + $0x98] sm:$0xf] %v815
    %944 = vst [vmem:[#allocation2 + $0x9c] sm:$0xf] %v816
    %945 = vst [vmem:[#allocation2 + $0xa0] sm:$0xf] %v817
    %946 = vst [vmem:[#allocation2 + $0xa4] sm:$0xf] %v818
    %947 = vst [vmem:[#allocation2 + $0xa8] sm:$0xf] %v819
    %948 = vst [vmem:[#allocation2 + $0xac] sm:$0xf] %v820
    %949 = vst [vmem:[#allocation2 + $0xb0] sm:$0xf] %v821
    %950 = vst [vmem:[#allocation2 + $0xb4] sm:$0xf] %v822
    %951 = vst [vmem:[#allocation2 + $0xb8] sm:$0xf] %v823
    %952 = vst [vmem:[#allocation2 + $0xbc] sm:$0xf] %v824
    %953 = vst [vmem:[#allocation2 + $0xc0] sm:$0xf] %v825
    %954 = vst [vmem:[#allocation2 + $0xc4] sm:$0xf] %v826
    %955 = vst [vmem:[#allocation2 + $0xc8] sm:$0xf] %v827
    %956 = vst [vmem:[#allocation2 + $0xcc] sm:$0xf] %v828
    %957 = vst [vmem:[#allocation2 + $0xd0] sm:$0xf] %v829
    %958 = vst [vmem:[#allocation2 + $0xd4] sm:$0xf] %v830
    %959 = vst [vmem:[#allocation2 + $0xd8] sm:$0xf] %v831
    %960 = vst [vmem:[#allocation2 + $0xdc] sm:$0xf] %v832
    %961 = vst [vmem:[#allocation2 + $0xe0] sm:$0xf] %v833
    %962 = vst [vmem:[#allocation2 + $0xe4] sm:$0xf] %v834
    %963 = vst [vmem:[#allocation2 + $0xe8] sm:$0xf] %v835
    %964 = vst [vmem:[#allocation2 + $0xec] sm:$0xf] %v836
    %965 = vst [vmem:[#allocation2 + $0xf0] sm:$0xf] %v837
    %966 = vst [vmem:[#allocation2 + $0xf4] sm:$0xf] %v838
    %967 = vst [vmem:[#allocation2 + $0xf8] sm:$0xf] %v839
    %968 = vst [vmem:[#allocation2 + $0xfc] sm:$0xf] %v840
    // Predicated region
    $region14: #{tpu_custom_call.1} parent=1 // pred_check
      _
    $region15: #{tpu_custom_call.1} parent=1 // pred_check_branch
      %970 = sbr.rel (0) target = $region17
    $region16: #{tpu_custom_call.1} parent=1 // pred_region
      %s972 = ssub.s32 4096, 4096
      %973 = vsyncadd [#allocation3], %s972
      %s974 = sshll.u32 [#allocation2], 4
      %s975 = int_to_ptr.vmem [resolvable:$true] %s974
      %980 = dma.vmem_to_hbm [thread:$0]  %s975, 4096, %s3, [#allocation3], 64, 64, 4
    $region17: #{tpu_custom_call.1} parent=1 // pred_fallthru
      _
    // Predicated region
    $region18: #{tpu_custom_call.1} parent=1 // pred_check
      _
    $region19: #{tpu_custom_call.1} parent=1 // pred_check_branch
      %982 = sbr.rel (0) target = $region21
    $region20: #{tpu_custom_call.1} parent=1 // pred_region
      %983 = dma.done [#allocation3], 4096
    $region21: #{tpu_custom_call.1} parent=1 // pred_fallthru
      _
    %984 = vsyncpa [#allocation3], 1

</llo_original>
